<compile_context>
chip_gen: v7x
topology: tpu7x:2x2x1
jax: 0.10.0
libtpu: 0.0.40
codegen_flags: <defaults>
</compile_context>

<pallas_src>
import functools

import jax
import jax.numpy as jnp
from jax.experimental import pallas as pl
from jax.experimental.pallas import tpu as pltpu


def find_factor(n):
    """Finds the most balanced integer factors for n (same as the PyTorch helper)."""
    for i in range(int(n ** 0.5), 0, -1):
        if n % i == 0:
            return (i, n // i)
    return (1, n)


def _round_up(x, m):
    return ((x + m - 1) // m) * m


def _round_down(x, m):
    return (x // m) * m


_LANE = 128
_ALIGN_M = 256                 # multiple of 128 (v5e MXU) and 256 (v6e/v7x MXU)
_VMEM_BUDGET = 32 << 20        # conservative working-set target (fits v5e/v6e/v7x)
_KRON_WEIGHT_LIMIT = 8 << 20   # max VMEM the dense kron(W0, W1) weight may occupy


def _choose_block_b(B, per_row_bytes, resident_bytes, itemsize, target=1024):
    """Batch tile: MXU/dtype aligned, VMEM-bounded, >= 2 grid steps for medium B."""
    # Minimum sublane packing granularity for the dtype (f32: 8, bf16: 16, int8: 32).
    sub = max(8, 32 // max(int(itemsize), 1))
    bb = _round_up(max(target, _ALIGN_M), _ALIGN_M)

    # Fit double-buffered per-row traffic next to the single-buffered weight(s).
    avail = max(_VMEM_BUDGET - resident_bytes, 4 << 20)
    cap = _round_down(avail // max(per_row_bytes, 1), sub)
    if cap >= sub:
        bb = min(bb, cap)

    if B <= sub:
        bb = sub
    elif B <= bb:
        # Would be a single grid step: split into (at least) 2 so the "parallel"
        # axis can feed both TensorCores on v7x megacore.
        half = (B + 1) // 2
        half = _round_up(half, _ALIGN_M if B >= 2 * _ALIGN_M else sub)
        bb = min(bb, max(half, sub))

    return max(min(bb, _round_up(B, sub)), sub)


# ---------------------------------------------------------------------------
# Path 1: small factors -> one dense lane-dense matmul with W = kron(W0, W1)^T
# ---------------------------------------------------------------------------

def _kron_matmul_kernel(x_ref, w_ref, o_ref, *, scale):
    # (block_b, d_in) @ (d_in, d_out_pad) on the MXU, f32 accumulation.
    acc = jnp.dot(x_ref[...], w_ref[...], preferred_element_type=jnp.float32)
    if scale != 1.0:
        acc = acc * scale          # f32 epilogue; rides a free VPU slot
    o_ref[...] = acc.astype(o_ref.dtype)


def precompute_kron_weight(w0, w1, *, dtype, pad_lanes=True):
    """kron(W0, W1)^T, shape (d_in, d_out[_lane_padded]).

    Compute this ONCE at parameter-load / adapter-update time and pass it to
    ndlinear_lora_forward, so the per-forward path pays no kron + HBM round trip.
    """
    p, a = w0.shape
    q, b = w1.shape
    d_out = p * q
    w = jnp.kron(w0.astype(jnp.float32), w1.astype(jnp.float32)).T  # (d_in, d_out)
    if pad_lanes and d_out > _LANE and d_out % _LANE != 0:
        # Lane-dense output slab -> unmasked stores in the kernel.
        w = jnp.pad(w, ((0, 0), (0, _round_up(d_out, _LANE) - d_out)))
    return w.astype(dtype)


def _forward_kron(x_flat, w_kron, d_out, scaling, block_b):
    B, d_in = x_flat.shape
    d_out_pad = w_kron.shape[1]
    isz = jnp.dtype(x_flat.dtype).itemsize
    wsz = jnp.dtype(w_kron.dtype).itemsize

    resident = d_in * d_out_pad * wsz                     # Buffered(1) weight
    per_row = 2 * d_in * isz + 2 * d_out_pad * isz        # double-buffered x / out
    bb = _choose_block_b(B, per_row, resident, isz, target=block_b)

    vmem_bytes = int(min(max(2 * (resident + bb * per_row), 32 << 20), 60 << 20))
    cost = pl.CostEstimate(
        flops=2 * B * d_in * d_out_pad,
        transcendentals=0,
        bytes_accessed=B * (d_in + d_out_pad) * isz + resident,
    )

    y = pl.pallas_call(
        functools.partial(_kron_matmul_kernel, scale=float(scaling)),
        out_shape=jax.ShapeDtypeStruct((B, d_out_pad), x_flat.dtype),
        grid_spec=pltpu.PrefetchScalarGridSpec(
            num_scalar_prefetch=0,
            grid=(pl.cdiv(B, bb),),      # no batch padding; ragged tail handled by Pallas
            in_specs=[
                pl.BlockSpec((bb, d_in), lambda i: (i, 0)),
                # Grid-invariant weight: single buffer (halves its VMEM footprint).
                pl.BlockSpec((d_in, d_out_pad), lambda i: (0, 0),
                             pipeline_mode=pl.Buffered(1)),
            ],
            out_specs=pl.BlockSpec((bb, d_out_pad), lambda i: (i, 0)),
        ),
        compiler_params=pltpu.CompilerParams(
            dimension_semantics=("parallel",),
            vmem_limit_bytes=vmem_bytes,
        ),
        cost_estimate=cost,
    )(x_flat, w_kron)

    if d_out_pad != d_out:
        y = y[:, :d_out]
    return y


# ---------------------------------------------------------------------------
# Path 2: large factors -> factored two-stage matmuls inside one kernel.
# Contracting the OUTER factor (a, with W0) first makes the (p, q)-major output
# layout fall out without any final transpose.
# ---------------------------------------------------------------------------

def _factored_kernel(x_ref, w0t_ref, w1t_ref, o_ref, *, scale, a, b, p, q):
    nb = x_ref.shape[0]
    x = x_ref[...]                                        # (nb, a, b)
    # Stage 1: u[n, j, p'] = sum_i x[n, i, j] * W0[p', i]
    xt = jnp.swapaxes(x, 1, 2).reshape(nb * b, a)
    u = jnp.dot(xt, w0t_ref[...], preferred_element_type=jnp.float32)   # (nb*b, p)
    # Stage 2: y[n, p', q'] = sum_j u[n, j, p'] * W1[q', j]
    ut = jnp.swapaxes(u.reshape(nb, b, p), 1, 2).reshape(nb * p, b)
    y = jnp.dot(ut.astype(x_ref.dtype), w1t_ref[...],
                preferred_element_type=jnp.float32)                     # (nb*p, q)
    y = y.reshape(nb, p * q)
    if scale != 1.0:
        y = y * scale
    o_ref[...] = y.astype(o_ref.dtype)


def _forward_factored(x_flat, w0, w1, scaling, block_b):
    B, d_in = x_flat.shape
    p, a = w0.shape
    q, b = w1.shape
    d_out = p * q
    isz = jnp.dtype(x_flat.dtype).itemsize

    x3 = x_flat.reshape(B, a, b)
    # Pre-transposed factor weights (tiny; hoist/cache with the params in practice).
    w0t = jnp.asarray(w0.T, dtype=x_flat.dtype)           # (a, p)
    w1t = jnp.asarray(w1.T, dtype=x_flat.dtype)           # (b, q)

    resident = (a * p + b * q) * isz                      # both Buffered(1)
    # double-buffered x / out + in-kernel temporaries (f32 u/y, transposed copies)
    per_row = (2 * d_in * isz + 2 * d_out * isz
               + 4 * (a * b + 2 * b * p + p * q) + isz * b * p)
    bb = _choose_block_b(B, per_row, resident, isz, target=block_b)

    vmem_bytes = int(min(max(2 * (resident + bb * per_row), 32 << 20), 60 << 20))
    cost = pl.CostEstimate(
        flops=2 * B * (a * b * p + b * p * q),
        transcendentals=0,
        bytes_accessed=B * (d_in + d_out) * isz + resident,
    )

    kern = functools.partial(_factored_kernel, scale=float(scaling), a=a, b=b, p=p, q=q)
    return pl.pallas_call(
        kern,
        out_shape=jax.ShapeDtypeStruct((B, d_out), x_flat.dtype),
        grid_spec=pltpu.PrefetchScalarGridSpec(
            num_scalar_prefetch=0,
            grid=(pl.cdiv(B, bb),),
            in_specs=[
                pl.BlockSpec((bb, a, b), lambda i: (i, 0, 0)),
                pl.BlockSpec((a, p), lambda i: (0, 0), pipeline_mode=pl.Buffered(1)),
                pl.BlockSpec((b, q), lambda i: (0, 0), pipeline_mode=pl.Buffered(1)),
            ],
            out_specs=pl.BlockSpec((bb, d_out), lambda i: (i, 0)),
        ),
        compiler_params=pltpu.CompilerParams(
            dimension_semantics=("parallel",),
            vmem_limit_bytes=vmem_bytes,
        ),
        cost_estimate=cost,
    )(x3, w0t, w1t)


# ---------------------------------------------------------------------------
# Public forward
# ---------------------------------------------------------------------------

def ndlinear_lora_forward(x, w0, w1, *, d_in, d_out, scaling=1.0,
                          block_b=1024, w_kron=None, path=None):
    """Pallas implementation of NdLinearLoRA.forward (inference / dropout off).

    x : (..., d_in)
    w0: (p, a) = nn.Linear(a -> p).weight
    w1: (q, b) = nn.Linear(b -> q).weight
    w_kron: optional precomputed kron weight (precompute_kron_weight), cached by caller.
    """
    a, b = find_factor(d_in)
    p, q = find_factor(d_out)
    assert x.shape[-1] == d_in
    assert w0.shape == (p, a) and w1.shape == (q, b)

    orig_shape = x.shape
    x_flat = x.reshape(-1, d_in)
    isz = jnp.dtype(x.dtype).itemsize

    if w_kron is not None:
        assert w_kron.shape[0] == d_in and w_kron.shape[1] >= d_out
        path = "kron"
    if path is None:
        d_out_pad = (_round_up(d_out, _LANE)
                     if (d_out > _LANE and d_out % _LANE != 0) else d_out)
        kron_ok = (max(a, b, p, q) <= _LANE
                   and d_in * d_out_pad * isz <= _KRON_WEIGHT_LIMIT)
        path = "kron" if kron_ok else "factored"

    if path == "kron":
        if w_kron is None:
            w_kron = precompute_kron_weight(w0, w1, dtype=x.dtype)
        y_flat = _forward_kron(x_flat, w_kron, d_out, scaling, block_b)
    else:
        y_flat = _forward_factored(x_flat, w0, w1, scaling, block_b)

    return y_flat.reshape(*orig_shape[:-1], d_out)


def _reference(x, w0, w1, *, d_in, d_out, scaling=1.0):
    """Pure-JAX reference matching NdLinear(transform_outer=False, bias=False)."""
    a, b = find_factor(d_in)
    orig_shape = x.shape
    xf = x.reshape(-1, a, b)
    y = jnp.einsum("nij,pi,qj->npq", xf, w0, w1)
    return (y.reshape(*orig_shape[:-1], d_out) * scaling).astype(x.dtype)


if __name__ == "__main__":
    # Small shapes consistent with the module: x (batch=2, seq=8, d_in=32), d_out=32.
    d_in, d_out = 32, 32
    alpha = 0.5                       # exercises the in-kernel scaling epilogue
    a, b = find_factor(d_in)          # (4, 8)
    p, q = find_factor(d_out)         # (4, 8)

    key = jax.random.PRNGKey(0)
    kx, k0, k1 = jax.random.split(key, 3)

    x = jax.random.normal(kx, (2, 8, d_in), dtype=jnp.float32)

    # Deterministic nn.Linear-style init: U(-1/sqrt(fan_in), 1/sqrt(fan_in)).
    w0 = jax.random.uniform(k0, (p, a), dtype=jnp.float32,
                            minval=-1.0 / a ** 0.5, maxval=1.0 / a ** 0.5)
    w1 = jax.random.uniform(k1, (q, b), dtype=jnp.float32,
                            minval=-1.0 / b ** 0.5, maxval=1.0 / b ** 0.5)

    y_ref = _reference(x, w0, w1, d_in=d_in, d_out=d_out, scaling=alpha)

    # Path 1 (auto-selected for small factors): dense kron matmul, weight hoisted.
    w_kron = precompute_kron_weight(w0, w1, dtype=x.dtype)
    y = ndlinear_lora_forward(x, w0, w1, d_in=d_in, d_out=d_out,
                              scaling=alpha, w_kron=w_kron)
    y = jax.block_until_ready(y)
    assert y.shape == (2, 8, d_out)
    assert jnp.allclose(y, y_ref, atol=1e-5, rtol=1e-5), "kron path mismatch"

    # Path 2 (forced here; auto-selected for large factors): factored two-stage kernel.
    y2 = ndlinear_lora_forward(x, w0, w1, d_in=d_in, d_out=d_out,
                               scaling=alpha, path="factored")
    y2 = jax.block_until_ready(y2)
    assert jnp.allclose(y2, y_ref, atol=1e-5, rtol=1e-5), "factored path mismatch"

    print("KERNEL_OK")
</pallas_src>

<mosaic_0001>
module attributes {stable_mosaic.version = 11 : i64} {
  func.func @_kron_matmul_kernel(%arg0: i32, %arg1: memref<8x32xf32, #tpu.memory_space<vmem>>, %arg2: memref<32x32xf32, #tpu.memory_space<vmem>>, %arg3: memref<8x32xf32, #tpu.memory_space<vmem>>) attributes {dimension_semantics = [#tpu.dimension_semantics<parallel>], iteration_bounds = array<i64: 2>, scalar_prefetch = 0 : i64, scratch_operands = 0 : i64, tpu.core_type = #tpu.core_type<tc>, window_params = [{transform_indices = @transform_0, window_bounds = array<i64: 8, 32>}, {pipeline_mode = #tpu.pipeline_mode<synchronous>, transform_indices = @transform_1, window_bounds = array<i64: 32, 32>}, {transform_indices = @transform_2, window_bounds = array<i64: 8, 32>}]} {
    %c0 = arith.constant 0 : index
    %c0_0 = arith.constant 0 : index
    %0 = vector.load %arg1[%c0, %c0_0] : memref<8x32xf32, #tpu.memory_space<vmem>>, vector<8x32xf32>
    %c0_1 = arith.constant 0 : index
    %c0_2 = arith.constant 0 : index
    %1 = vector.load %arg2[%c0_1, %c0_2] : memref<32x32xf32, #tpu.memory_space<vmem>>, vector<32x32xf32>
    %cst = arith.constant dense<0.000000e+00> : vector<8x32xf32>
    %2 = tpu.matmul %0, %1, %cst {dimension_numbers = #tpu.dot_dimension_numbers<[1], [0], [0], [1], [0, 0, 1, 1], [], []>} : vector<8x32xf32>, vector<32x32xf32>, vector<8x32xf32> -> vector<8x32xf32>
    %cst_3 = arith.constant 5.000000e-01 : f32
    %3 = vector.broadcast %cst_3 : f32 to vector<8x32xf32>
    %4 = arith.mulf %2, %3 : vector<8x32xf32>
    %c0_4 = arith.constant 0 : index
    %c0_5 = arith.constant 0 : index
    %5 = vector.load %arg3[%c0_4, %c0_5] : memref<8x32xf32, #tpu.memory_space<vmem>>, vector<8x32xf32>
    tpu.vector_store %arg3[%c0_4, %c0_5], %4 {strides = array<i32>} : memref<8x32xf32, #tpu.memory_space<vmem>>, vector<8x32xf32>,
    return
  }
  func.func @transform_0(%arg0: i32) -> (i32, i32) {
    %c0_i32 = arith.constant 0 : i32
    %c0_i32_0 = arith.constant 0 : i32
    return %arg0, %c0_i32 : i32, i32
  }
  func.func @transform_1(%arg0: i32) -> (i32, i32) {
    %c0_i32 = arith.constant 0 : i32
    %c0_i32_0 = arith.constant 0 : i32
    %c0_i32_1 = arith.constant 0 : i32
    return %c0_i32, %c0_i32_0 : i32, i32
  }
  func.func @transform_2(%arg0: i32) -> (i32, i32) {
    %c0_i32 = arith.constant 0 : i32
    %c0_i32_0 = arith.constant 0 : i32
    return %arg0, %c0_i32 : i32, i32
  }
}

</mosaic_0001>

<llo_original>
// kernel: tpu_custom_call.1
$region0: #{tpu_custom_call.1}
  #allocation0 [shape = 'u32[]', space=smem, size = 0x4, offset = 0x4, fixed_abs, tag = 'smem constant byte address 0x4 - core index']
  #allocation1 [shape = 'u32[144,128]{1,0:T(1,128)}', space=vmem, size = 0x12000, scoped, tag = 'internal scratch']
  %s0 = inlined_call_operand.hbm [shape: f32[16,32], index: 0, kind: input, shape index: {}]
  %s1 = inlined_call_operand.hbm [shape: f32[32,32], index: 1, kind: input, shape index: {}]
  %s2 = inlined_call_operand.hbm [shape: f32[16,32], index: 2, kind: output, shape index: {}]
  %s3 = sld [smem:[#allocation0]]
  $region49: #{tpu_custom_call.1} parent=0
    _
  %s5 = ssub.s32 1, %s3
  %s6 = scalar_select 0, %s5, %s3
  $region1: #{tpu_custom_call.1} parent=0
    #allocation2 [shape = 'u8[8192]{0}', space=vmem, size = 0x2000, scoped, tag = 'input window, operand 0']
    #allocation3 [shape = 's32[2]{0}', space=sflag, size = 0x8, scoped, tag = 'scoped memory for tpu_custom_call.1']
    #allocation4 [shape = 's32[2]{0}', space=sflag, size = 0x8, scoped, tag = 'scoped memory for tpu_custom_call.1']
    #allocation5 [shape = 'u8[16384]{0}', space=vmem, size = 0x4000, scoped, tag = 'input window, operand 1, single buffered']
    #allocation6 [shape = 's32[1]{0}', space=sflag, size = 0x4, scoped, tag = 'scoped memory for tpu_custom_call.1']
    #allocation7 [shape = 'u8[8192]{0}', space=vmem, size = 0x2000, scoped, tag = 'output window, operand 0']
    %7 = vsyncpa [#allocation3], 0
    %s8 = scalar_lea.sflag [#allocation3], 1
    %9 = vsyncpa %s8, 0
    %10 = vsyncpa [#allocation6], 0
    %11 = vsyncpa [#allocation4], 0
    %s12 = scalar_lea.sflag [#allocation4], 1
    %13 = vsyncpa %s12, 0
    loop: start=0, step=1, limit=4
    $region2: #{tpu_custom_call.1} parent=1 // loop_pre_header
      _
    $region3: #{tpu_custom_call.1} parent=1 // loop_header
      %s15 = sphi 0, %s19
      %p16 = scmp.ge.s32.totalorder %s15, 4
      %s25 = sphi 0, %s27
      %s28 = sphi 0, %s25
      %s29 = sphi 0, %s28
      %s45 = sphi 0, %s29
      %s49 = sphi 0, %s49
      %s51 = sphi 0, %s49
      %s52 = sphi 0, %s51
      %s66 = sphi 0, %s52
      %s72 = sphi 0, %s74
      %s75 = sphi 0, %s72
      %s76 = sphi 0, %s75
      %s92 = sphi 0, %s76
    $region4: #{tpu_custom_call.1} parent=1 // loop_header_branch
      %18 = sbr.rel (%p16) target = $region8
    $region5: #{tpu_custom_call.1} parent=1 // loop_body
      %s20 = ssub.s32 %s15, 1
      %s21 = ssub.s32 %s15, 2
      %s22 = sadd.s32 %s15, 1
      %s23 = ssub.s32 %s15, %s22
      %p24 = scmp.eq.s32.totalorder %s23, 0
      %s26 = sadd.s32 %s25, 1
      %s27 = scalar_select %p24, %s25, %s26
      %p30 = pneg %p24
      %p31 = scmp.eq.s32.totalorder %s15, 1
      %p32 = por %p30, %p31
      %p33 = scmp.ne.s32.totalorder %s25, %s28
      %p34 = scmp.eq.s32.totalorder %s15, 0
      %p35 = por %p33, %p34
      %p36 = scmp.ne.s32.totalorder %s25, %s28
      %p37 = scmp.eq.s32.totalorder %s20, 1
      %p38 = por %p36, %p37
      %p39 = scmp.ne.s32.totalorder %s28, %s29
      %p40 = scmp.eq.s32.totalorder %s20, 0
      %p41 = por %p39, %p40
      %p42 = scmp.ne.s32.totalorder %s28, %s29
      %p43 = scmp.eq.s32.totalorder %s21, 1
      %p44 = por %p42, %p43
      %p46 = scmp.ne.s32.totalorder %s29, %s45
      %p47 = scmp.eq.s32.totalorder %s21, 0
      %p48 = por %p46, %p47
      %s50 = sadd.s32 %s49, 1
      %p53 = scmp.eq.s32.totalorder %s15, 1
      %p54 = scmp.ne.s32.totalorder %s49, %s51
      %p55 = scmp.eq.s32.totalorder %s15, 0
      %p56 = por %p54, %p55
      %p57 = scmp.ne.s32.totalorder %s49, %s51
      %p58 = scmp.eq.s32.totalorder %s20, 1
      %p59 = por %p57, %p58
      %p60 = scmp.ne.s32.totalorder %s51, %s52
      %p61 = scmp.eq.s32.totalorder %s20, 0
      %p62 = por %p60, %p61
      %p63 = scmp.ne.s32.totalorder %s51, %s52
      %p64 = scmp.eq.s32.totalorder %s21, 1
      %p65 = por %p63, %p64
      %p67 = scmp.ne.s32.totalorder %s52, %s66
      %p68 = scmp.eq.s32.totalorder %s21, 0
      %p69 = por %p67, %p68
      %s70 = ssub.s32 %s15, %s22
      %p71 = scmp.eq.s32.totalorder %s70, 0
      %s73 = sadd.s32 %s72, 1
      %s74 = scalar_select %p71, %s72, %s73
      %p77 = pneg %p71
      %p78 = scmp.eq.s32.totalorder %s15, 1
      %p79 = por %p77, %p78
      %p80 = scmp.ne.s32.totalorder %s72, %s75
      %p81 = scmp.eq.s32.totalorder %s15, 0
      %p82 = por %p80, %p81
      %p83 = scmp.ne.s32.totalorder %s72, %s75
      %p84 = scmp.eq.s32.totalorder %s20, 1
      %p85 = por %p83, %p84
      %p86 = scmp.ne.s32.totalorder %s75, %s76
      %p87 = scmp.eq.s32.totalorder %s20, 0
      %p88 = por %p86, %p87
      %p89 = scmp.ne.s32.totalorder %s75, %s76
      %p90 = scmp.eq.s32.totalorder %s21, 1
      %p91 = por %p89, %p90
      %p93 = scmp.ne.s32.totalorder %s76, %s92
      %p94 = scmp.eq.s32.totalorder %s21, 0
      %p95 = por %p93, %p94
      %p96 = scmp.le.s32.totalorder 1, %s15
      %p97 = scmp.lt.s32.totalorder %s15, 3
      %p98 = pnand %p96, %p97
      %p99 = pneg %p98
      // Predicated region
      $region9: #{tpu_custom_call.1} parent=5 // pred_check
        _
      $region10: #{tpu_custom_call.1} parent=5 // pred_check_branch
        %101 = sbr.rel (%p98) target = $region12
      $region11: #{tpu_custom_call.1} parent=5 // pred_region
        %s102 = ssub.s32 %s15, 1
        // Predicated region
        $region13: #{tpu_custom_call.1} parent=11 // pred_check
          %p103 = pneg %p62
        $region14: #{tpu_custom_call.1} parent=11 // pred_check_branch
          %105 = sbr.rel (%p103) target = $region16
        $region15: #{tpu_custom_call.1} parent=11 // pred_region
          %s107 = ssub.s32 512, 512
          %108 = vsyncadd [#allocation6], %s107
          %s109 = sshll.u32 [#allocation5], 4
          %s110 = int_to_ptr.vmem [resolvable:$true] %s109
          %115 = dma.hbm_to_vmem [thread:$0]  %s1, 512, %s110, [#allocation6], 128, 128, 8
        $region16: #{tpu_custom_call.1} parent=11 // pred_fallthru
          _
      $region12: #{tpu_custom_call.1} parent=5 // pred_fallthru
        _
      %p116 = scmp.lt.s32.totalorder %s15, 2
      // Predicated region
      $region17: #{tpu_custom_call.1} parent=5 // pred_check
        %p117 = pneg %p116
      $region18: #{tpu_custom_call.1} parent=5 // pred_check_branch
        %119 = sbr.rel (%p117) target = $region20
      $region19: #{tpu_custom_call.1} parent=5 // pred_region
        // Predicated region
        $region21: #{tpu_custom_call.1} parent=19 // pred_check
          %p120 = pneg %p35
        $region22: #{tpu_custom_call.1} parent=19 // pred_check_branch
          %122 = sbr.rel (%p120) target = $region24
        $region23: #{tpu_custom_call.1} parent=19 // pred_region
          %s123 = sand.u32 %s25, 1
          %s124 = scalar_lea.sflag [#allocation3], %s123
          %s125 = sand.u32 %s25, 1
          %s126 = smul.addr %s125, 8
          %s127 = scalar_lea.vmem [#allocation2], %s126
          %s129 = ssub.s32 128, 128
          %130 = vsyncadd %s124, %s129
          %s131 = smul.addr %s15, 128
          %s132 = scalar_lea.hbm %s0, %s131
          %s134 = sshll.u32 %s127, 4
          %s135 = int_to_ptr.vmem [resolvable:$true] %s134
          %137 = dma.hbm_to_vmem [thread:$0]  %s132, 128, %s135, %s124
        $region24: #{tpu_custom_call.1} parent=19 // pred_fallthru
          _
      $region20: #{tpu_custom_call.1} parent=5 // pred_fallthru
        _
      %p138 = scmp.le.s32.totalorder 1, %s15
      %p139 = scmp.lt.s32.totalorder %s15, 3
      %p140 = pnand %p138, %p139
      %p141 = pneg %p140
      // Predicated region
      $region25: #{tpu_custom_call.1} parent=5 // pred_check
        _
      $region26: #{tpu_custom_call.1} parent=5 // pred_check_branch
        %143 = sbr.rel (%p140) target = $region28
      $region27: #{tpu_custom_call.1} parent=5 // pred_region
        %s144 = ssub.s32 %s15, 1
        %s145 = sand.u32 %s28, 1
        %s146 = scalar_lea.sflag [#allocation3], %s145
        %s147 = sand.u32 %s28, 1
        %s148 = smul.addr %s147, 8
        %s149 = scalar_lea.vmem [#allocation2], %s148
        // Predicated region
        $region29: #{tpu_custom_call.1} parent=27 // pred_check
          %p150 = pneg %p41
        $region30: #{tpu_custom_call.1} parent=27 // pred_check_branch
          %152 = sbr.rel (%p150) target = $region32
        $region31: #{tpu_custom_call.1} parent=27 // pred_region
          %153 = dma.done %s146, 128
        $region32: #{tpu_custom_call.1} parent=27 // pred_fallthru
          _
        // Predicated region
        $region33: #{tpu_custom_call.1} parent=27 // pred_check
          %p154 = pneg %p62
        $region34: #{tpu_custom_call.1} parent=27 // pred_check_branch
          %156 = sbr.rel (%p154) target = $region36
        $region35: #{tpu_custom_call.1} parent=27 // pred_region
          %157 = dma.done [#allocation6], 512
        $region36: #{tpu_custom_call.1} parent=27 // pred_fallthru
          _
        %s158 = sand.u32 %s28, 1
        %s159 = scalar_lea.sflag [#allocation3], %s158
        %s160 = sand.u32 %s28, 1
        %s161 = smul.addr %s160, 8
        %s162 = scalar_lea.vmem [#allocation2], %s161
        %p163 = pneg %p41
        %p164 = pneg %p38
        %p165 = pneg %p62
        %p166 = pneg %p59
        %p167 = pneg %p88
        %p168 = pneg %p85
        %s169 = sand.u32 %s75, 1
        %s170 = scalar_lea.sflag [#allocation4], %s169
        %s171 = sand.u32 %s75, 1
        %s172 = smul.addr %s171, 8
        %s173 = scalar_lea.vmem [#allocation7], %s172
        %v174 = vld [vmem:[%s149] sm:$0xff]
        %v175 = vld [vmem:[#allocation5] sm:$0xff]
        %v176 = vld [vmem:[#allocation5 + $0x8] sm:$0xff]
        %v177 = vld [vmem:[#allocation5 + $0x10] sm:$0xff]
        %v178 = vld [vmem:[#allocation5 + $0x18] sm:$0xff]
        %vm179 = vcmask 261120
        %v181 = vsel %vm179, %v174, 0
        %183 = vmatprep.subr.mxu0 0.0
        %184 = vmatpush1.msra.mxu0 %v175
        %185 = vmatprep.subr.mxu0 0.0
        %186 = vmatpush1.msra.mxu0 %v176
        %187 = vmatprep.subr.mxu0 0.0
        %188 = vmatpush1.msra.mxu0 %v177
        %189 = vmatprep.subr.mxu0 0.0
        %190 = vmatpush1.msra.mxu0 %v178
        %191 = vmatprep.subr.mxu0 0.0
        %192 = vmatpush1.msra.mxu0 0.0
        %193 = vmatprep.subr.mxu0 0.0
        %194 = vmatpush1.msra.mxu0 0.0
        %195 = vmatprep.subr.mxu0 0.0
        %196 = vmatpush1.msra.mxu0 0.0
        %197 = vmatprep.subr.mxu0 0.0
        %198 = vmatpush1.msra.mxu0 0.0
        %199 = vmatprep.subr.mxu0 0.0
        %200 = vmatpush1.msra.mxu0 0.0
        %201 = vmatprep.subr.mxu0 0.0
        %202 = vmatpush1.msra.mxu0 0.0
        %203 = vmatprep.subr.mxu0 0.0
        %204 = vmatpush1.msra.mxu0 0.0
        %205 = vmatprep.subr.mxu0 0.0
        %206 = vmatpush1.msra.mxu0 0.0
        %207 = vmatprep.subr.mxu0 0.0
        %208 = vmatpush1.msra.mxu0 0.0
        %209 = vmatprep.subr.mxu0 0.0
        %210 = vmatpush1.msra.mxu0 0.0
        %211 = vmatprep.subr.mxu0 0.0
        %212 = vmatpush1.msra.mxu0 0.0
        %213 = vmatprep.subr.mxu0 0.0
        %214 = vmatpush1.msra.mxu0 0.0
        %215 = vmatprep.subr.mxu0 0.0
        %216 = vmatpush1.msra.mxu0 0.0
        %217 = vmatprep.subr.mxu0 0.0
        %218 = vmatpush1.msra.mxu0 0.0
        %219 = vmatprep.subr.mxu0 0.0
        %220 = vmatpush1.msra.mxu0 0.0
        %221 = vmatprep.subr.mxu0 0.0
        %222 = vmatpush1.msra.mxu0 0.0
        %223 = vmatprep.subr.mxu0 0.0
        %224 = vmatpush1.msra.mxu0 0.0
        %225 = vmatprep.subr.mxu0 0.0
        %226 = vmatpush1.msra.mxu0 0.0
        %227 = vmatprep.subr.mxu0 0.0
        %228 = vmatpush1.msra.mxu0 0.0
        %229 = vmatprep.subr.mxu0 0.0
        %230 = vmatpush1.msra.mxu0 0.0
        %231 = vmatprep.subr.mxu0 0.0
        %232 = vmatpush1.msra.mxu0 0.0
        %233 = vmatprep.subr.mxu0 0.0
        %234 = vmatpush1.msra.mxu0 0.0
        %235 = vmatprep.subr.mxu0 0.0
        %236 = vmatpush1.msra.mxu0 0.0
        %237 = vmatprep.subr.mxu0 0.0
        %238 = vmatpush1.msra.mxu0 0.0
        %239 = vmatprep.subr.mxu0 0.0
        %240 = vmatpush1.msra.mxu0 0.0
        %241 = vmatprep.subr.mxu0 0.0
        %242 = vmatpush1.msra.mxu0 0.0
        %243 = vmatprep.subr.mxu0 0.0
        %244 = vmatpush1.msra.mxu0 0.0
        %245 = vmatprep.subr.mxu0 0.0
        %246 = vmatpush1.msra.mxu0 0.0
        %247 = vmatprep.mubr.f32.mxu0 0.0
        %248 = vmatmul.mubr.f32.gmra.mrb[0].mxu0 %v181
        %v249 = vpop.f32.mrb[0].mxu0
        %v250 = vadd.f32 0.0, %v249
        %v251 = vpop.f32.mrb[0].mxu0
        %252 = vdwg.mxu0
        %v253 = vmul.f32 %v250, 0.5
        %254 = vst.msk [vmem:[%s173] sm:$0xff] %vm179, %v253
        %s255 = sand.u32 %s75, 1
        %s256 = scalar_lea.sflag [#allocation4], %s255
        %s257 = sand.u32 %s75, 1
        %s258 = smul.addr %s257, 8
        %s259 = scalar_lea.vmem [#allocation7], %s258
        // Predicated region
        $region37: #{tpu_custom_call.1} parent=27 // pred_check
          %p260 = pneg %p85
        $region38: #{tpu_custom_call.1} parent=27 // pred_check_branch
          %262 = sbr.rel (%p260) target = $region40
        $region39: #{tpu_custom_call.1} parent=27 // pred_region
          %s264 = ssub.s32 128, 128
          %265 = vsyncadd %s256, %s264
          %s266 = smul.addr %s20, 128
          %s267 = scalar_lea.hbm %s2, %s266
          %s269 = sshll.u32 %s259, 4
          %s270 = int_to_ptr.vmem [resolvable:$true] %s269
          %272 = dma.vmem_to_hbm [thread:$0]  %s270, 128, %s267, %s256
        $region40: #{tpu_custom_call.1} parent=27 // pred_fallthru
          _
      $region28: #{tpu_custom_call.1} parent=5 // pred_fallthru
        _
      %p273 = scmp.le.s32.totalorder 2, %s15
      // Predicated region
      $region41: #{tpu_custom_call.1} parent=5 // pred_check
        %p274 = pneg %p273
      $region42: #{tpu_custom_call.1} parent=5 // pred_check_branch
        %276 = sbr.rel (%p274) target = $region44
      $region43: #{tpu_custom_call.1} parent=5 // pred_region
        %s277 = ssub.s32 %s15, 2
        // Predicated region
        $region45: #{tpu_custom_call.1} parent=43 // pred_check
          %p278 = pneg %p91
        $region46: #{tpu_custom_call.1} parent=43 // pred_check_branch
          %280 = sbr.rel (%p278) target = $region48
        $region47: #{tpu_custom_call.1} parent=43 // pred_region
          %s281 = sand.u32 %s76, 1
          %s282 = scalar_lea.sflag [#allocation4], %s281
          %s283 = sand.u32 %s76, 1
          %s284 = smul.addr %s283, 8
          %s285 = scalar_lea.vmem [#allocation7], %s284
          %286 = dma.done %s282, 128
        $region48: #{tpu_custom_call.1} parent=43 // pred_fallthru
          _
      $region44: #{tpu_custom_call.1} parent=5 // pred_fallthru
        _
    $region6: #{tpu_custom_call.1} parent=1 // loop_footer
      %s19 = sadd.s32 1, %s15
    $region7: #{tpu_custom_call.1} parent=1 // loop_footer_branch
      %14 = sbr.rel target = $region3
    $region8: #{tpu_custom_call.1} parent=1 // loop_exit
      _
    %287 = vsyncpa [#allocation3], 1
    %s288 = scalar_lea.sflag [#allocation3], 1
    %289 = vsyncpa %s288, 1
    %290 = vsyncpa [#allocation6], 1
    %291 = vsyncpa [#allocation4], 1
    %s292 = scalar_lea.sflag [#allocation4], 1
    %293 = vsyncpa %s292, 1

</llo_original>
